<compile_context>
chip_gen: v6e
topology: v6e:2x2x1
jax: 0.10.0
libtpu: 0.0.40
codegen_flags: <defaults>
</compile_context>

<pallas_src>
import jax
import jax.numpy as jnp
from jax.experimental import pallas as pl
from jax.experimental.pallas import tpu as pltpu


def _round_up(x, m):
    return ((x + m - 1) // m) * m


def _make_kernel(hw_total, hw_tile, needs_mask):
    num_slices = hw_tile // 128

    def kernel(x_ref, w_ref, shift_ref, o_ref, acc_ref):
        # x_ref:     (Nb, C_in, hw_tile)  input chunk (native dtype)
        # w_ref:     (C_in, C_out_pad)    1x1 conv weight with BN scale folded (f32)
        # shift_ref: (1, C_out_pad)       BN shift = beta - mean * scale (f32)
        # o_ref:     (Nb, 1, C_out_pad)   output block (resident across k)
        # acc_ref:   (Nb, C_in, 128)      per-lane running-max partials (native dtype)
        k = pl.program_id(1)
        last = pl.num_programs(1) - 1

        @pl.when(k == 0)
        def _init():
            acc_ref[...] = jnp.full(acc_ref.shape, -jnp.inf, acc_ref.dtype)

        def accumulate_full():
            # Pure elementwise (VPU) maxima into 128-lane partials; aligned static
            # slices, no cross-lane reduce or relayout in the hot loop.
            for i in range(num_slices):
                sl = x_ref[:, :, pl.ds(i * 128, 128)]
                acc_ref[...] = jnp.maximum(acc_ref[...], sl)

        def accumulate_masked():
            # Cold path: only ever runs on the last H*W block.
            lane = jax.lax.broadcasted_iota(jnp.int32, (1, 1, 128), 2)
            neg_inf = jnp.array(-jnp.inf, dtype=acc_ref.dtype)
            base = hw_total - k * hw_tile
            for i in range(num_slices):
                sl = x_ref[:, :, pl.ds(i * 128, 128)]
                sl = jnp.where(lane < (base - i * 128), sl, neg_inf)
                acc_ref[...] = jnp.maximum(acc_ref[...], sl)

        if needs_mask:
            @pl.when(k < last)
            def _fast():
                accumulate_full()

            @pl.when(k == last)
            def _tail():
                accumulate_masked()
        else:
            accumulate_full()

        @pl.when(k == last)
        def _epilogue():
            # Single cross-lane (XLU) reduce + relayout, once per batch block.
            pooled = jnp.max(acc_ref[...], axis=-1).astype(jnp.float32)  # (Nb, C_in)
            y = jnp.dot(pooled, w_ref[...], preferred_element_type=jnp.float32)
            y = y + shift_ref[...]
            y = jnp.maximum(y, 0.0)                                      # ReLU
            o_ref[...] = y.astype(o_ref.dtype).reshape(o_ref.shape)

    return kernel


def aspp_pooling(x_nchw, conv_w, bn_gamma, bn_beta, bn_mean, bn_var, eps=1e-5):
    """AdaptiveMaxPool2d((1,1)) -> 1x1 Conv (no bias) -> BatchNorm2d (eval) -> ReLU.

    x_nchw: (N, C_in, H, W); conv_w: (C_out, C_in, 1, 1) as in nn.Conv2d.
    """
    N, C_in, H, W = x_nchw.shape
    C_out = conv_w.shape[0]
    HW = H * W
    x3 = x_nchw.reshape(N, C_in, HW)

    # Eval-mode BN folded into the conv: y = pooled @ (w^T * scale) + shift.
    # TODO(synk): training-mode BN (batch statistics over the pooled tensor) is
    # not reproduced.
    scale = bn_gamma.astype(jnp.float32) / jnp.sqrt(bn_var.astype(jnp.float32) + eps)
    shift = bn_beta.astype(jnp.float32) - bn_mean.astype(jnp.float32) * scale
    w = conv_w.reshape(C_out, C_in).T.astype(jnp.float32) * scale[None, :]  # (C_in, C_out)

    # Lane-dense output: pad C_out to a multiple of 128, slice after the call.
    C_out_pad = _round_up(C_out, 128)
    w_pad = jnp.zeros((C_in, C_out_pad), jnp.float32).at[:, :C_out].set(w)
    shift_pad = jnp.zeros((1, C_out_pad), jnp.float32).at[:, :C_out].set(shift)

    # ---------------- generation-aware VMEM budgeting ----------------
    itemsize = jnp.dtype(x_nchw.dtype).itemsize
    C_in_pad8 = _round_up(C_in, 8)  # sublane padding in VMEM
    try:
        vmem_cap = pltpu.get_tpu_info().vmem_capacity_bytes
    except Exception:
        vmem_cap = 64 * 1024 * 1024
    # v5e/v6e (128 MiB VMEM) -> 64 MiB scoped limit; v7x (64 MiB) -> 32 MiB.
    vmem_limit = min(max(vmem_cap // 2, 32 * 1024 * 1024), 64 * 1024 * 1024)
    budget = int(vmem_limit * 0.8)

    # Residents other than the x tile (conservatively assume double-buffered).
    w_bytes = C_in_pad8 * C_out_pad * 4
    shift_bytes = 8 * C_out_pad * 4
    fixed_bytes = 2 * (w_bytes + shift_bytes)
    acc1_bytes = C_in_pad8 * 128 * itemsize  # accumulator per image

    # H*W tile: largest multiple of 128 lanes whose 2 x-buffers fit the budget.
    per_lane128 = 2 * C_in_pad8 * 128 * itemsize
    avail = max(budget - fixed_bytes - acc1_bytes, per_lane128)
    m_max = max(1, avail // per_lane128)
    hw_tile = min(_round_up(HW, 128), m_max * 128)
    num_hw_blocks = pl.cdiv(HW, hw_tile)
    needs_mask = (HW % hw_tile) != 0

    # Batch blocking when per-image data is small (amortizes per-step overhead
    # and lifts the epilogue matmul from M=1 to M=Nb).
    per_image = 2 * C_in_pad8 * hw_tile * itemsize + acc1_bytes
    Nb = max(1, min(N, (budget - fixed_bytes) // per_image))
    if num_hw_blocks == 1 and N > 1:
        # Keep >=2 batch grid steps so both v7x TensorCores get work.
        Nb = min(Nb, pl.cdiv(N, 2))
    num_n_blocks = pl.cdiv(N, Nb)

    kernel = _make_kernel(HW, hw_tile, needs_mask)

    def build(single_buffer_weights):
        wk = {"pipeline_mode": pl.Buffered(1)} if single_buffer_weights else {}
        return pl.pallas_call(
            kernel,
            out_shape=jax.ShapeDtypeStruct((N, 1, C_out_pad), x_nchw.dtype),
            grid_spec=pltpu.PrefetchScalarGridSpec(
                num_scalar_prefetch=0,
                grid=(num_n_blocks, num_hw_blocks),            # reduction axis last
                in_specs=[
                    pl.BlockSpec((Nb, C_in, hw_tile), lambda n, k: (n, 0, k)),
                    pl.BlockSpec((C_in, C_out_pad), lambda n, k: (0, 0), **wk),
                    pl.BlockSpec((1, C_out_pad), lambda n, k: (0, 0), **wk),
                ],
                out_specs=pl.BlockSpec((Nb, 1, C_out_pad), lambda n, k: (n, 0, 0)),
                scratch_shapes=[pltpu.VMEM((Nb, C_in, 128), x_nchw.dtype)],
            ),
            compiler_params=pltpu.CompilerParams(
                dimension_semantics=("parallel", "arbitrary"),
                vmem_limit_bytes=vmem_limit,
            ),
        )

    try:
        # Loop-invariant operands single-buffered (reclaims VMEM for larger tiles).
        out3 = build(True)(x3, w_pad, shift_pad)
    except Exception:
        out3 = build(False)(x3, w_pad, shift_pad)

    return out3[:, 0, :C_out].reshape(N, C_out, 1, 1)


if __name__ == "__main__":
    # Small shapes consistent with the module: batch=2, inplanes=4, spatial=16, outplanes=8.
    key = jax.random.PRNGKey(0)
    k_x, k_w, k_g, k_b, k_m, k_v = jax.random.split(key, 6)

    N, C_in, H, W = 2, 4, 16, 16
    C_out = 8

    x = jax.random.normal(k_x, (N, C_in, H, W), dtype=jnp.float32)
    conv_w = jax.random.normal(k_w, (C_out, C_in, 1, 1), dtype=jnp.float32) * 0.1
    bn_gamma = 1.0 + 0.1 * jax.random.normal(k_g, (C_out,), dtype=jnp.float32)
    bn_beta = 0.1 * jax.random.normal(k_b, (C_out,), dtype=jnp.float32)
    bn_mean = 0.05 * jax.random.normal(k_m, (C_out,), dtype=jnp.float32)
    bn_var = jnp.abs(1.0 + 0.1 * jax.random.normal(k_v, (C_out,), dtype=jnp.float32))

    out = aspp_pooling(x, conv_w, bn_gamma, bn_beta, bn_mean, bn_var)
    out = jax.block_until_ready(out)

    # Reference in plain JAX (same semantics: max pool -> 1x1 conv -> eval-mode BN -> ReLU).
    pooled_ref = jnp.max(x, axis=(2, 3))                                     # (N, C_in)
    y_ref = pooled_ref @ conv_w.reshape(C_out, C_in).T                       # (N, C_out)
    scale_ref = bn_gamma / jnp.sqrt(bn_var + 1e-5)
    y_ref = y_ref * scale_ref + (bn_beta - bn_mean * scale_ref)
    y_ref = jnp.maximum(y_ref, 0.0).reshape(N, C_out, 1, 1)

    assert out.shape == (N, C_out, 1, 1)
    assert jnp.allclose(out, y_ref, atol=1e-5, rtol=1e-5)

    print("KERNEL_OK")
</pallas_src>

<mosaic_0001>
module attributes {stable_mosaic.version = 11 : i64} {
  func.func @kernel(%arg0: i32, %arg1: i32, %arg2: memref<1x4x256xf32, #tpu.memory_space<vmem>>, %arg3: memref<4x128xf32, #tpu.memory_space<vmem>>, %arg4: memref<1x128xf32, #tpu.memory_space<vmem>>, %arg5: memref<1x1x128xf32, #tpu.memory_space<vmem>>, %arg6: memref<1x4x128xf32, #tpu.memory_space<vmem>>) attributes {dimension_semantics = [#tpu.dimension_semantics<parallel>, #tpu.dimension_semantics<arbitrary>], iteration_bounds = array<i64: 2, 1>, scalar_prefetch = 0 : i64, scratch_operands = 1 : i64, tpu.core_type = #tpu.core_type<tc>, window_params = [{transform_indices = @transform_0, window_bounds = array<i64: 1, 4, 256>}, {pipeline_mode = #tpu.pipeline_mode<synchronous>, transform_indices = @transform_1, window_bounds = array<i64: 4, 128>}, {pipeline_mode = #tpu.pipeline_mode<synchronous>, transform_indices = @transform_2, window_bounds = array<i64: 1, 128>}, {transform_indices = @transform_3, window_bounds = array<i64: 1, 1, 128>}]} {
    %c0_i32 = arith.constant 0 : i32
    %0 = arith.cmpi eq, %arg1, %c0_i32 : i32
    %1 = arith.extui %0 : i1 to i32
    %c0_i32_0 = arith.constant 0 : i32
    %2 = arith.cmpi ne, %1, %c0_i32_0 : i32
    scf.if %2 {
      %cst = arith.constant 0xFF800000 : f32
      %14 = vector.broadcast %cst : f32 to vector<1x4x128xf32>
      %c0_19 = arith.constant 0 : index
      %c0_20 = arith.constant 0 : index
      %c0_21 = arith.constant 0 : index
      %15 = vector.load %arg6[%c0_19, %c0_20, %c0_21] : memref<1x4x128xf32, #tpu.memory_space<vmem>>, vector<1x4x128xf32>
      tpu.vector_store %arg6[%c0_19, %c0_20, %c0_21], %14 {strides = array<i32>} : memref<1x4x128xf32, #tpu.memory_space<vmem>>, vector<1x4x128xf32>,
    } else {
    }
    %c0 = arith.constant 0 : index
    %c0_1 = arith.constant 0 : index
    %c0_2 = arith.constant 0 : index
    %3 = vector.load %arg2[%c0, %c0_1, %c0_2] : memref<1x4x256xf32, #tpu.memory_space<vmem>>, vector<1x4x128xf32>
    %c0_3 = arith.constant 0 : index
    %c0_4 = arith.constant 0 : index
    %c0_5 = arith.constant 0 : index
    %4 = vector.load %arg6[%c0_3, %c0_4, %c0_5] : memref<1x4x128xf32, #tpu.memory_space<vmem>>, vector<1x4x128xf32>
    %5 = arith.maximumf %4, %3 : vector<1x4x128xf32>
    %c0_6 = arith.constant 0 : index
    %c0_7 = arith.constant 0 : index
    %c0_8 = arith.constant 0 : index
    %6 = vector.load %arg6[%c0_6, %c0_7, %c0_8] : memref<1x4x128xf32, #tpu.memory_space<vmem>>, vector<1x4x128xf32>
    tpu.vector_store %arg6[%c0_6, %c0_7, %c0_8], %5 {strides = array<i32>} : memref<1x4x128xf32, #tpu.memory_space<vmem>>, vector<1x4x128xf32>,
    %c0_9 = arith.constant 0 : index
    %c0_10 = arith.constant 0 : index
    %c128 = arith.constant 128 : index
    %7 = vector.load %arg2[%c0_9, %c0_10, %c128] : memref<1x4x256xf32, #tpu.memory_space<vmem>>, vector<1x4x128xf32>
    %c0_11 = arith.constant 0 : index
    %c0_12 = arith.constant 0 : index
    %c0_13 = arith.constant 0 : index
    %8 = vector.load %arg6[%c0_11, %c0_12, %c0_13] : memref<1x4x128xf32, #tpu.memory_space<vmem>>, vector<1x4x128xf32>
    %9 = arith.maximumf %8, %7 : vector<1x4x128xf32>
    %c0_14 = arith.constant 0 : index
    %c0_15 = arith.constant 0 : index
    %c0_16 = arith.constant 0 : index
    %10 = vector.load %arg6[%c0_14, %c0_15, %c0_16] : memref<1x4x128xf32, #tpu.memory_space<vmem>>, vector<1x4x128xf32>
    tpu.vector_store %arg6[%c0_14, %c0_15, %c0_16], %9 {strides = array<i32>} : memref<1x4x128xf32, #tpu.memory_space<vmem>>, vector<1x4x128xf32>,
    %c0_i32_17 = arith.constant 0 : i32
    %11 = arith.cmpi eq, %arg1, %c0_i32_17 : i32
    %12 = arith.extui %11 : i1 to i32
    %c0_i32_18 = arith.constant 0 : i32
    %13 = arith.cmpi ne, %12, %c0_i32_18 : i32
    scf.if %13 {
      %c0_19 = arith.constant 0 : index
      %c0_20 = arith.constant 0 : index
      %c0_21 = arith.constant 0 : index
      %14 = vector.load %arg6[%c0_19, %c0_20, %c0_21] : memref<1x4x128xf32, #tpu.memory_space<vmem>>, vector<1x4x128xf32>
      %cst = arith.constant dense<0xFF800000> : vector<1x4xf32>
      %15 = vector.multi_reduction <maximumf>, %14, %cst [2] : vector<1x4x128xf32> to vector<1x4xf32>
      %c0_22 = arith.constant 0 : index
      %c0_23 = arith.constant 0 : index
      %16 = vector.load %arg3[%c0_22, %c0_23] : memref<4x128xf32, #tpu.memory_space<vmem>>, vector<4x128xf32>
      %cst_24 = arith.constant dense<0.000000e+00> : vector<1x128xf32>
      %17 = tpu.matmul %15, %16, %cst_24 {dimension_numbers = #tpu.dot_dimension_numbers<[1], [0], [0], [1], [0, 0, 1, 1], [], []>} : vector<1x4xf32>, vector<4x128xf32>, vector<1x128xf32> -> vector<1x128xf32>
      %c0_25 = arith.constant 0 : index
      %c0_26 = arith.constant 0 : index
      %18 = vector.load %arg4[%c0_25, %c0_26] : memref<1x128xf32, #tpu.memory_space<vmem>>, vector<1x128xf32>
      %19 = arith.addf %17, %18 : vector<1x128xf32>
      %cst_27 = arith.constant 0.000000e+00 : f32
      %20 = vector.broadcast %cst_27 : f32 to vector<1x128xf32>
      %21 = arith.maximumf %19, %20 : vector<1x128xf32>
      %22 = vector.shape_cast %21 : vector<1x128xf32> to vector<1x1x128xf32>
      %c0_28 = arith.constant 0 : index
      %c0_29 = arith.constant 0 : index
      %c0_30 = arith.constant 0 : index
      %23 = vector.load %arg5[%c0_28, %c0_29, %c0_30] : memref<1x1x128xf32, #tpu.memory_space<vmem>>, vector<1x1x128xf32>
      tpu.vector_store %arg5[%c0_28, %c0_29, %c0_30], %22 {strides = array<i32>} : memref<1x1x128xf32, #tpu.memory_space<vmem>>, vector<1x1x128xf32>,
    } else {
    }
    return
  }
  func.func @transform_0(%arg0: i32, %arg1: i32) -> (i32, i32, i32) {
    %c0_i32 = arith.constant 0 : i32
    %c0_i32_0 = arith.constant 0 : i32
    return %arg0, %c0_i32, %arg1 : i32, i32, i32
  }
  func.func @transform_1(%arg0: i32, %arg1: i32) -> (i32, i32) {
    %c0_i32 = arith.constant 0 : i32
    %c0_i32_0 = arith.constant 0 : i32
    %c0_i32_1 = arith.constant 0 : i32
    return %c0_i32, %c0_i32_0 : i32, i32
  }
  func.func @transform_2(%arg0: i32, %arg1: i32) -> (i32, i32) {
    %c0_i32 = arith.constant 0 : i32
    %c0_i32_0 = arith.constant 0 : i32
    %c0_i32_1 = arith.constant 0 : i32
    return %c0_i32, %c0_i32_0 : i32, i32
  }
  func.func @transform_3(%arg0: i32, %arg1: i32) -> (i32, i32, i32) {
    %c0_i32 = arith.constant 0 : i32
    %c0_i32_0 = arith.constant 0 : i32
    %c0_i32_1 = arith.constant 0 : i32
    return %arg0, %c0_i32, %c0_i32_0 : i32, i32, i32
  }
}

module attributes {stable_mosaic.version = 11 : i64} {
  func.func @kernel(%arg0: i32, %arg1: i32, %arg2: memref<1x4x256xf32, #tpu.memory_space<vmem>>, %arg3: memref<4x128xf32, #tpu.memory_space<vmem>>, %arg4: memref<1x128xf32, #tpu.memory_space<vmem>>, %arg5: memref<1x1x128xf32, #tpu.memory_space<vmem>>, %arg6: memref<1x4x128xf32, #tpu.memory_space<vmem>>) attributes {dimension_semantics = [#tpu.dimension_semantics<parallel>, #tpu.dimension_semantics<arbitrary>], iteration_bounds = array<i64: 2, 1>, scalar_prefetch = 0 : i64, scratch_operands = 1 : i64, tpu.core_type = #tpu.core_type<tc>, window_params = [{transform_indices = @transform_0, window_bounds = array<i64: 1, 4, 256>}, {pipeline_mode = #tpu.pipeline_mode<synchronous>, transform_indices = @transform_1, window_bounds = array<i64: 4, 128>}, {pipeline_mode = #tpu.pipeline_mode<synchronous>, transform_indices = @transform_2, window_bounds = array<i64: 1, 128>}, {transform_indices = @transform_3, window_bounds = array<i64: 1, 1, 128>}]} {
    %c0_i32 = arith.constant 0 : i32
    %0 = arith.cmpi eq, %arg1, %c0_i32 : i32
    %1 = arith.extui %0 : i1 to i32
    %c0_i32_0 = arith.constant 0 : i32
    %2 = arith.cmpi ne, %1, %c0_i32_0 : i32
    scf.if %2 {
      %cst = arith.constant 0xFF800000 : f32
      %14 = vector.broadcast %cst : f32 to vector<1x4x128xf32>
      %c0_19 = arith.constant 0 : index
      %c0_20 = arith.constant 0 : index
      %c0_21 = arith.constant 0 : index
      %15 = vector.load %arg6[%c0_19, %c0_20, %c0_21] : memref<1x4x128xf32, #tpu.memory_space<vmem>>, vector<1x4x128xf32>
      tpu.vector_store %arg6[%c0_19, %c0_20, %c0_21], %14 {strides = array<i32>} : memref<1x4x128xf32, #tpu.memory_space<vmem>>, vector<1x4x128xf32>,
    } else {
    }
    %c0 = arith.constant 0 : index
    %c0_1 = arith.constant 0 : index
    %c0_2 = arith.constant 0 : index
    %3 = vector.load %arg2[%c0, %c0_1, %c0_2] : memref<1x4x256xf32, #tpu.memory_space<vmem>>, vector<1x4x128xf32>
    %c0_3 = arith.constant 0 : index
    %c0_4 = arith.constant 0 : index
    %c0_5 = arith.constant 0 : index
    %4 = vector.load %arg6[%c0_3, %c0_4, %c0_5] : memref<1x4x128xf32, #tpu.memory_space<vmem>>, vector<1x4x128xf32>
    %5 = arith.maximumf %4, %3 : vector<1x4x128xf32>
    %c0_6 = arith.constant 0 : index
    %c0_7 = arith.constant 0 : index
    %c0_8 = arith.constant 0 : index
    %6 = vector.load %arg6[%c0_6, %c0_7, %c0_8] : memref<1x4x128xf32, #tpu.memory_space<vmem>>, vector<1x4x128xf32>
    tpu.vector_store %arg6[%c0_6, %c0_7, %c0_8], %5 {strides = array<i32>} : memref<1x4x128xf32, #tpu.memory_space<vmem>>, vector<1x4x128xf32>,
    %c0_9 = arith.constant 0 : index
    %c0_10 = arith.constant 0 : index
    %c128 = arith.constant 128 : index
    %7 = vector.load %arg2[%c0_9, %c0_10, %c128] : memref<1x4x256xf32, #tpu.memory_space<vmem>>, vector<1x4x128xf32>
    %c0_11 = arith.constant 0 : index
    %c0_12 = arith.constant 0 : index
    %c0_13 = arith.constant 0 : index
    %8 = vector.load %arg6[%c0_11, %c0_12, %c0_13] : memref<1x4x128xf32, #tpu.memory_space<vmem>>, vector<1x4x128xf32>
    %9 = arith.maximumf %8, %7 : vector<1x4x128xf32>
    %c0_14 = arith.constant 0 : index
    %c0_15 = arith.constant 0 : index
    %c0_16 = arith.constant 0 : index
    %10 = vector.load %arg6[%c0_14, %c0_15, %c0_16] : memref<1x4x128xf32, #tpu.memory_space<vmem>>, vector<1x4x128xf32>
    tpu.vector_store %arg6[%c0_14, %c0_15, %c0_16], %9 {strides = array<i32>} : memref<1x4x128xf32, #tpu.memory_space<vmem>>, vector<1x4x128xf32>,
    %c0_i32_17 = arith.constant 0 : i32
    %11 = arith.cmpi eq, %arg1, %c0_i32_17 : i32
    %12 = arith.extui %11 : i1 to i32
    %c0_i32_18 = arith.constant 0 : i32
    %13 = arith.cmpi ne, %12, %c0_i32_18 : i32
    scf.if %13 {
      %c0_19 = arith.constant 0 : index
      %c0_20 = arith.constant 0 : index
      %c0_21 = arith.constant 0 : index
      %14 = vector.load %arg6[%c0_19, %c0_20, %c0_21] : memref<1x4x128xf32, #tpu.memory_space<vmem>>, vector<1x4x128xf32>
      %cst = arith.constant dense<0xFF800000> : vector<1x4xf32>
      %15 = vector.multi_reduction <maximumf>, %14, %cst [2] : vector<1x4x128xf32> to vector<1x4xf32>
      %c0_22 = arith.constant 0 : index
      %c0_23 = arith.constant 0 : index
      %16 = vector.load %arg3[%c0_22, %c0_23] : memref<4x128xf32, #tpu.memory_space<vmem>>, vector<4x128xf32>
      %cst_24 = arith.constant dense<0.000000e+00> : vector<1x128xf32>
      %17 = tpu.matmul %15, %16, %cst_24 {dimension_numbers = #tpu.dot_dimension_numbers<[1], [0], [0], [1], [0, 0, 1, 1], [], []>} : vector<1x4xf32>, vector<4x128xf32>, vector<1x128xf32> -> vector<1x128xf32>
      %c0_25 = arith.constant 0 : index
      %c0_26 = arith.constant 0 : index
      %18 = vector.load %arg4[%c0_25, %c0_26] : memref<1x128xf32, #tpu.memory_space<vmem>>, vector<1x128xf32>
      %19 = arith.addf %17, %18 : vector<1x128xf32>
      %cst_27 = arith.constant 0.000000e+00 : f32
      %20 = vector.broadcast %cst_27 : f32 to vector<1x128xf32>
      %21 = arith.maximumf %19, %20 : vector<1x128xf32>
      %22 = vector.shape_cast %21 : vector<1x128xf32> to vector<1x1x128xf32>
      %c0_28 = arith.constant 0 : index
      %c0_29 = arith.constant 0 : index
      %c0_30 = arith.constant 0 : index
      %23 = vector.load %arg5[%c0_28, %c0_29, %c0_30] : memref<1x1x128xf32, #tpu.memory_space<vmem>>, vector<1x1x128xf32>
      tpu.vector_store %arg5[%c0_28, %c0_29, %c0_30], %22 {strides = array<i32>} : memref<1x1x128xf32, #tpu.memory_space<vmem>>, vector<1x1x128xf32>,
    } else {
    }
    return
  }
  func.func @transform_0(%arg0: i32, %arg1: i32) -> (i32, i32, i32) {
    %c0_i32 = arith.constant 0 : i32
    %c0_i32_0 = arith.constant 0 : i32
    return %arg0, %c0_i32, %arg1 : i32, i32, i32
  }
  func.func @transform_1(%arg0: i32, %arg1: i32) -> (i32, i32) {
    %c0_i32 = arith.constant 0 : i32
    %c0_i32_0 = arith.constant 0 : i32
    %c0_i32_1 = arith.constant 0 : i32
    return %c0_i32, %c0_i32_0 : i32, i32
  }
  func.func @transform_2(%arg0: i32, %arg1: i32) -> (i32, i32) {
    %c0_i32 = arith.constant 0 : i32
    %c0_i32_0 = arith.constant 0 : i32
    %c0_i32_1 = arith.constant 0 : i32
    return %c0_i32, %c0_i32_0 : i32, i32
  }
  func.func @transform_3(%arg0: i32, %arg1: i32) -> (i32, i32, i32) {
    %c0_i32 = arith.constant 0 : i32
    %c0_i32_0 = arith.constant 0 : i32
    %c0_i32_1 = arith.constant 0 : i32
    return %arg0, %c0_i32, %c0_i32_0 : i32, i32, i32
  }
}

</mosaic_0001>

<llo_original>
// kernel: tpu_custom_call.1
$region0: #{tpu_custom_call.1}
  #allocation0 [shape = 'u32[]', space=smem, size = 0x4, offset = 0x4, fixed_abs, tag = 'smem constant byte address 0x4 - core index']
  #allocation1 [shape = 'u32[144,128]{1,0:T(1,128)}', space=vmem, size = 0x12000, scoped, tag = 'internal scratch']
  #allocation2 [shape = 'f32[1,4,128]{2,1,0:T(4,128)}', space=vmem, size = 0x800, scoped, tag = 'scratch operand']
  %s0 = inlined_call_operand.hbm [shape: f32[2,4,256], index: 0, kind: input, shape index: {}]
  %s1 = inlined_call_operand.hbm [shape: f32[4,128], index: 1, kind: input, shape index: {}]
  %s2 = inlined_call_operand.vmem [shape: f32[1,128], index: 2, kind: input, shape index: {}]
  %s3 = inlined_call_operand.hbm [shape: f32[2,1,128], index: 3, kind: output, shape index: {}]
  %s4 = sld [smem:[#allocation0]]
  $region61: #{tpu_custom_call.1} parent=0
    _
  %s6 = ssub.s32 1, %s4
  %s7 = scalar_select 0, %s6, %s4
  $region1: #{tpu_custom_call.1} parent=0
    #allocation3 [shape = 'u8[8192]{0}', space=vmem, size = 0x2000, scoped, tag = 'input window, operand 0']
    #allocation4 [shape = 's32[2]{0}', space=sflag, size = 0x8, scoped, tag = 'scoped memory for tpu_custom_call.1']
    #allocation5 [shape = 's32[2]{0}', space=sflag, size = 0x8, scoped, tag = 'scoped memory for tpu_custom_call.1']
    #allocation6 [shape = 'u8[2048]{0}', space=vmem, size = 0x800, scoped, tag = 'input window, operand 1, single buffered']
    #allocation7 [shape = 's32[1]{0}', space=sflag, size = 0x4, scoped, tag = 'scoped memory for tpu_custom_call.1']
    #allocation8 [shape = 'u8[1024]{0}', space=vmem, size = 0x400, scoped, tag = 'output window, operand 0']
    %8 = vsyncpa [#allocation4], 0
    %s9 = scalar_lea.sflag [#allocation4], 1
    %10 = vsyncpa %s9, 0
    %11 = vsyncpa [#allocation7], 0
    %12 = vsyncpa [#allocation5], 0
    %s13 = scalar_lea.sflag [#allocation5], 1
    %14 = vsyncpa %s13, 0
    loop: start=0, step=1, limit=4
    $region2: #{tpu_custom_call.1} parent=1 // loop_pre_header
      _
    $region3: #{tpu_custom_call.1} parent=1 // loop_header
      %s16 = sphi 0, %s20
      %p17 = scmp.ge.s32.totalorder %s16, 4
      %s23 = sphi 0, %s35
      %s24 = sphi 0, %s31
      %s25 = sphi 0, %s23
      %s26 = sphi 0, %s24
      %s27 = sphi 0, %s25
      %s28 = sphi 0, %s26
      %s40 = sphi 0, %s42
      %s43 = sphi 0, %s40
      %s44 = sphi 0, %s43
      %s60 = sphi 0, %s44
      %s64 = sphi 0, %s64
      %s66 = sphi 0, %s64
      %s67 = sphi 0, %s66
      %s81 = sphi 0, %s67
      %s85 = sphi 0, %s85
      %s87 = sphi 0, %s85
      %s88 = sphi 0, %s87
      %s102 = sphi 0, %s88
      %s108 = sphi 0, %s110
      %s111 = sphi 0, %s108
      %s112 = sphi 0, %s111
      %s128 = sphi 0, %s112
    $region4: #{tpu_custom_call.1} parent=1 // loop_header_branch
      %19 = sbr.rel (%p17) target = $region8
    $region5: #{tpu_custom_call.1} parent=1 // loop_body
      %s21 = ssub.s32 %s16, 1
      %s22 = ssub.s32 %s16, 2
      %s29 = sadd.s32 1, %s24
      %p30 = scmp.ge.s32.totalorder %s29, 1
      %s31 = scalar_select %p30, 0, %s29
      %s32 = sadd.s32 1, %s23
      %s33 = scalar_select %p30, %s32, %s23
      %p34 = scmp.ge.s32.totalorder %s33, 2
      %s35 = scalar_select %p34, 0, %s33
      %s36 = ssub.s32 %s23, %s35
      %s37 = ssub.s32 %s24, %s31
      %s38 = sor.u32 %s36, %s37
      %p39 = scmp.eq.s32.totalorder %s38, 0
      %s41 = sadd.s32 %s40, 1
      %s42 = scalar_select %p39, %s40, %s41
      %p45 = pneg %p39
      %p46 = scmp.eq.s32.totalorder %s16, 1
      %p47 = por %p45, %p46
      %p48 = scmp.ne.s32.totalorder %s40, %s43
      %p49 = scmp.eq.s32.totalorder %s16, 0
      %p50 = por %p48, %p49
      %p51 = scmp.ne.s32.totalorder %s40, %s43
      %p52 = scmp.eq.s32.totalorder %s21, 1
      %p53 = por %p51, %p52
      %p54 = scmp.ne.s32.totalorder %s43, %s44
      %p55 = scmp.eq.s32.totalorder %s21, 0
      %p56 = por %p54, %p55
      %p57 = scmp.ne.s32.totalorder %s43, %s44
      %p58 = scmp.eq.s32.totalorder %s22, 1
      %p59 = por %p57, %p58
      %p61 = scmp.ne.s32.totalorder %s44, %s60
      %p62 = scmp.eq.s32.totalorder %s22, 0
      %p63 = por %p61, %p62
      %s65 = sadd.s32 %s64, 1
      %p68 = scmp.eq.s32.totalorder %s16, 1
      %p69 = scmp.ne.s32.totalorder %s64, %s66
      %p70 = scmp.eq.s32.totalorder %s16, 0
      %p71 = por %p69, %p70
      %p72 = scmp.ne.s32.totalorder %s64, %s66
      %p73 = scmp.eq.s32.totalorder %s21, 1
      %p74 = por %p72, %p73
      %p75 = scmp.ne.s32.totalorder %s66, %s67
      %p76 = scmp.eq.s32.totalorder %s21, 0
      %p77 = por %p75, %p76
      %p78 = scmp.ne.s32.totalorder %s66, %s67
      %p79 = scmp.eq.s32.totalorder %s22, 1
      %p80 = por %p78, %p79
      %p82 = scmp.ne.s32.totalorder %s67, %s81
      %p83 = scmp.eq.s32.totalorder %s22, 0
      %p84 = por %p82, %p83
      %s86 = sadd.s32 %s85, 1
      %p89 = scmp.eq.s32.totalorder %s16, 1
      %p90 = scmp.ne.s32.totalorder %s85, %s87
      %p91 = scmp.eq.s32.totalorder %s16, 0
      %p92 = por %p90, %p91
      %p93 = scmp.ne.s32.totalorder %s85, %s87
      %p94 = scmp.eq.s32.totalorder %s21, 1
      %p95 = por %p93, %p94
      %p96 = scmp.ne.s32.totalorder %s87, %s88
      %p97 = scmp.eq.s32.totalorder %s21, 0
      %p98 = por %p96, %p97
      %p99 = scmp.ne.s32.totalorder %s87, %s88
      %p100 = scmp.eq.s32.totalorder %s22, 1
      %p101 = por %p99, %p100
      %p103 = scmp.ne.s32.totalorder %s88, %s102
      %p104 = scmp.eq.s32.totalorder %s22, 0
      %p105 = por %p103, %p104
      %s106 = ssub.s32 %s23, %s35
      %p107 = scmp.eq.s32.totalorder %s106, 0
      %s109 = sadd.s32 %s108, 1
      %s110 = scalar_select %p107, %s108, %s109
      %p113 = pneg %p107
      %p114 = scmp.eq.s32.totalorder %s16, 1
      %p115 = por %p113, %p114
      %p116 = scmp.ne.s32.totalorder %s108, %s111
      %p117 = scmp.eq.s32.totalorder %s16, 0
      %p118 = por %p116, %p117
      %p119 = scmp.ne.s32.totalorder %s108, %s111
      %p120 = scmp.eq.s32.totalorder %s21, 1
      %p121 = por %p119, %p120
      %p122 = scmp.ne.s32.totalorder %s111, %s112
      %p123 = scmp.eq.s32.totalorder %s21, 0
      %p124 = por %p122, %p123
      %p125 = scmp.ne.s32.totalorder %s111, %s112
      %p126 = scmp.eq.s32.totalorder %s22, 1
      %p127 = por %p125, %p126
      %p129 = scmp.ne.s32.totalorder %s112, %s128
      %p130 = scmp.eq.s32.totalorder %s22, 0
      %p131 = por %p129, %p130
      %p132 = scmp.le.s32.totalorder 1, %s16
      %p133 = scmp.lt.s32.totalorder %s16, 3
      %p134 = pnand %p132, %p133
      %p135 = pneg %p134
      // Predicated region
      $region9: #{tpu_custom_call.1} parent=5 // pred_check
        _
      $region10: #{tpu_custom_call.1} parent=5 // pred_check_branch
        %137 = sbr.rel (%p134) target = $region12
      $region11: #{tpu_custom_call.1} parent=5 // pred_region
        %s138 = ssub.s32 %s16, 1
        // Predicated region
        $region13: #{tpu_custom_call.1} parent=11 // pred_check
          %p139 = pneg %p77
        $region14: #{tpu_custom_call.1} parent=11 // pred_check_branch
          %141 = sbr.rel (%p139) target = $region16
        $region15: #{tpu_custom_call.1} parent=11 // pred_region
          %s143 = ssub.s32 64, 64
          %144 = vsyncadd [#allocation7], %s143
          %s146 = sshll.u32 [#allocation6], 4
          %s147 = int_to_ptr.vmem [resolvable:$true] %s146
          %149 = dma.hbm_to_vmem [thread:$0]  %s1, 64, %s147, [#allocation7]
        $region16: #{tpu_custom_call.1} parent=11 // pred_fallthru
          _
        // Predicated region
        $region17: #{tpu_custom_call.1} parent=11 // pred_check
          %p150 = pneg %p98
        $region18: #{tpu_custom_call.1} parent=11 // pred_check_branch
          %152 = sbr.rel (%p150) target = $region20
        $region19: #{tpu_custom_call.1} parent=11 // pred_region
          _
        $region20: #{tpu_custom_call.1} parent=11 // pred_fallthru
          _
      $region12: #{tpu_custom_call.1} parent=5 // pred_fallthru
        _
      %p153 = scmp.lt.s32.totalorder %s16, 2
      // Predicated region
      $region21: #{tpu_custom_call.1} parent=5 // pred_check
        %p154 = pneg %p153
      $region22: #{tpu_custom_call.1} parent=5 // pred_check_branch
        %156 = sbr.rel (%p154) target = $region24
      $region23: #{tpu_custom_call.1} parent=5 // pred_region
        // Predicated region
        $region25: #{tpu_custom_call.1} parent=23 // pred_check
          %p157 = pneg %p50
        $region26: #{tpu_custom_call.1} parent=23 // pred_check_branch
          %159 = sbr.rel (%p157) target = $region28
        $region27: #{tpu_custom_call.1} parent=23 // pred_region
          %s160 = sand.u32 %s40, 1
          %s161 = scalar_lea.sflag [#allocation4], %s160
          %s162 = sand.u32 %s40, 1
          %s163 = smul.addr %s162, 8
          %s164 = scalar_lea.vmem [#allocation3], %s163
          %s165 = smul.u32 2, %s24
          %s167 = ssub.s32 128, 128
          %168 = vsyncadd %s161, %s167
          %s169 = smul.addr %s23, 2
          %s170 = sadd.s32 %s165, %s169
          %s171 = smul.addr %s170, 64
          %s172 = scalar_lea.hbm %s0, %s171
          %s174 = sshll.u32 %s164, 4
          %s175 = int_to_ptr.vmem [resolvable:$true] %s174
          %177 = dma.hbm_to_vmem [thread:$0]  %s172, 128, %s175, %s161
        $region28: #{tpu_custom_call.1} parent=23 // pred_fallthru
          _
      $region24: #{tpu_custom_call.1} parent=5 // pred_fallthru
        _
      %p178 = scmp.le.s32.totalorder 1, %s16
      %p179 = scmp.lt.s32.totalorder %s16, 3
      %p180 = pnand %p178, %p179
      %p181 = pneg %p180
      // Predicated region
      $region29: #{tpu_custom_call.1} parent=5 // pred_check
        _
      $region30: #{tpu_custom_call.1} parent=5 // pred_check_branch
        %183 = sbr.rel (%p180) target = $region32
      $region31: #{tpu_custom_call.1} parent=5 // pred_region
        %s184 = ssub.s32 %s16, 1
        %s185 = sand.u32 %s43, 1
        %s186 = scalar_lea.sflag [#allocation4], %s185
        %s187 = sand.u32 %s43, 1
        %s188 = smul.addr %s187, 8
        %s189 = scalar_lea.vmem [#allocation3], %s188
        // Predicated region
        $region33: #{tpu_custom_call.1} parent=31 // pred_check
          %p190 = pneg %p56
        $region34: #{tpu_custom_call.1} parent=31 // pred_check_branch
          %192 = sbr.rel (%p190) target = $region36
        $region35: #{tpu_custom_call.1} parent=31 // pred_region
          %193 = dma.done %s186, 128
        $region36: #{tpu_custom_call.1} parent=31 // pred_fallthru
          _
        // Predicated region
        $region37: #{tpu_custom_call.1} parent=31 // pred_check
          %p194 = pneg %p77
        $region38: #{tpu_custom_call.1} parent=31 // pred_check_branch
          %196 = sbr.rel (%p194) target = $region40
        $region39: #{tpu_custom_call.1} parent=31 // pred_region
          %197 = dma.done [#allocation7], 64
        $region40: #{tpu_custom_call.1} parent=31 // pred_fallthru
          _
        %s198 = sand.u32 %s43, 1
        %s199 = scalar_lea.sflag [#allocation4], %s198
        %s200 = sand.u32 %s43, 1
        %s201 = smul.addr %s200, 8
        %s202 = scalar_lea.vmem [#allocation3], %s201
        %p203 = pneg %p56
        %p204 = pneg %p53
        %p205 = pneg %p77
        %p206 = pneg %p74
        %p207 = pneg %p98
        %p208 = pneg %p95
        %p209 = pneg %p124
        %p210 = pneg %p121
        %s211 = sand.u32 %s111, 1
        %s212 = scalar_lea.sflag [#allocation5], %s211
        %s213 = sand.u32 %s111, 1
        %s214 = scalar_lea.vmem [#allocation8], %s213
        %s215 = smul.u32 2, %s26
        %p216 = scmp.eq.s32.totalorder %s26, 0
        // Predicated region
        $region41: #{tpu_custom_call.1} parent=31 // pred_check
          %p217 = pneg %p216
        $region42: #{tpu_custom_call.1} parent=31 // pred_check_branch
          %219 = sbr.rel (%p217) target = $region44
        $region43: #{tpu_custom_call.1} parent=31 // pred_region
          %220 = vst [vmem:[#allocation2] sm:$0xf] -inf
        $region44: #{tpu_custom_call.1} parent=31 // pred_fallthru
          _
        %v221 = vld [vmem:[%s189] sm:$0xf]
        %v222 = vld [vmem:[#allocation2] sm:$0xf]
        %v223 = vmax.f32 %v222, %v221
        %224 = vst [vmem:[#allocation2] sm:$0xf] %v223
        %v225 = vld [vmem:[%s189 + $0x4] sm:$0xf]
        %v226 = vld [vmem:[#allocation2] sm:$0xf]
        %v227 = vmax.f32 %v226, %v225
        %228 = vst [vmem:[#allocation2] sm:$0xf] %v227
        // Predicated region
        $region45: #{tpu_custom_call.1} parent=31 // pred_check
          %p229 = pneg %p216
        $region46: #{tpu_custom_call.1} parent=31 // pred_check_branch
          %231 = sbr.rel (%p229) target = $region48
        $region47: #{tpu_custom_call.1} parent=31 // pred_region
          %v232 = vld [vmem:[#allocation2] sm:$0xf]
          %vm233 = vcmask 1043456
          %v234 = vsel %vm233, %v232, -inf
          %235 = vmax.xlane.f32.xlu0 %v234
          %v236 = vpop.xlane.xlu0 %235
          %v237 = vld [vmem:[#allocation6] sm:$0xf]
          %v238 = vld [vmem:[%s2] sm:$0x1]
          %v240 = vlaneseq
          %v241 = vand.u32 %v240, 127
          %v242 = vlaneseq
          %v243 = vshrl.u32 %v242, 7
          %v244 = vsub.s32 %v241, %v243
          %v245 = vrot.slane %v236, %v244
          %vm246 = vcmask 31744
          %v247 = vsel %vm246, %v245, 0
          %v250 = vsel %vm233, %v237, 0
          %252 = vmatprep.subr.mxu0 0.0
          %253 = vmatpush1.msra.mxu0 0.0
          %254 = vmatprep.subr.mxu0 0.0
          %255 = vmatpush1.msra.mxu0 0.0
          %256 = vmatprep.subr.mxu0 0.0
          %257 = vmatpush1.msra.mxu0 0.0
          %258 = vmatprep.subr.mxu0 0.0
          %259 = vmatpush1.msra.mxu0 0.0
          %260 = vmatprep.subr.mxu0 0.0
          %261 = vmatpush1.msra.mxu0 0.0
          %262 = vmatprep.subr.mxu0 0.0
          %263 = vmatpush1.msra.mxu0 0.0
          %264 = vmatprep.subr.mxu0 0.0
          %265 = vmatpush1.msra.mxu0 0.0
          %266 = vmatprep.subr.mxu0 0.0
          %267 = vmatpush1.msra.mxu0 0.0
          %268 = vmatprep.subr.mxu0 0.0
          %269 = vmatpush1.msra.mxu0 0.0
          %270 = vmatprep.subr.mxu0 0.0
          %271 = vmatpush1.msra.mxu0 0.0
          %272 = vmatprep.subr.mxu0 0.0
          %273 = vmatpush1.msra.mxu0 0.0
          %274 = vmatprep.subr.mxu0 0.0
          %275 = vmatpush1.msra.mxu0 0.0
          %276 = vmatprep.subr.mxu0 0.0
          %277 = vmatpush1.msra.mxu0 0.0
          %278 = vmatprep.subr.mxu0 0.0
          %279 = vmatpush1.msra.mxu0 0.0
          %280 = vmatprep.subr.mxu0 0.0
          %281 = vmatpush1.msra.mxu0 0.0
          %282 = vmatprep.subr.mxu0 0.0
          %283 = vmatpush1.msra.mxu0 %v250
          %284 = vmatprep.subr.mxu0 0.0
          %285 = vmatpush2.msra.mxu0 0.0
          %286 = vmatprep.subr.mxu0 0.0
          %287 = vmatpush2.msra.mxu0 0.0
          %288 = vmatprep.subr.mxu0 0.0
          %289 = vmatpush2.msra.mxu0 0.0
          %290 = vmatprep.subr.mxu0 0.0
          %291 = vmatpush2.msra.mxu0 0.0
          %292 = vmatprep.subr.mxu0 0.0
          %293 = vmatpush2.msra.mxu0 0.0
          %294 = vmatprep.subr.mxu0 0.0
          %295 = vmatpush2.msra.mxu0 0.0
          %296 = vmatprep.subr.mxu0 0.0
          %297 = vmatpush2.msra.mxu0 0.0
          %298 = vmatprep.subr.mxu0 0.0
          %299 = vmatpush2.msra.mxu0 0.0
          %300 = vmatprep.subr.mxu0 0.0
          %301 = vmatpush2.msra.mxu0 0.0
          %302 = vmatprep.subr.mxu0 0.0
          %303 = vmatpush2.msra.mxu0 0.0
          %304 = vmatprep.subr.mxu0 0.0
          %305 = vmatpush2.msra.mxu0 0.0
          %306 = vmatprep.subr.mxu0 0.0
          %307 = vmatpush2.msra.mxu0 0.0
          %308 = vmatprep.subr.mxu0 0.0
          %309 = vmatpush2.msra.mxu0 0.0
          %310 = vmatprep.subr.mxu0 0.0
          %311 = vmatpush2.msra.mxu0 0.0
          %312 = vmatprep.subr.mxu0 0.0
          %313 = vmatpush2.msra.mxu0 0.0
          %314 = vmatprep.subr.mxu0 0.0
          %315 = vmatpush2.msra.mxu0 0.0
          %316 = vmatprep.mubr.f32.mxu0 0.0
          %317 = vmatmul.mubr.f32.gmra.mxu0 %v247
          %v318 = vpop.f32.mrf.mxu0
          %v319 = vadd.f32 %v238, %v318
          %v320 = vpop.f32.mrf.mxu0
          %321 = vdwg.mxu0
          %v322 = vmax.f32 %v319, 0.0
          %323 = vst [vmem:[%s214] sm:$0x1] %v322
        $region48: #{tpu_custom_call.1} parent=31 // pred_fallthru
          _
        %s324 = sand.u32 %s111, 1
        %s325 = scalar_lea.sflag [#allocation5], %s324
        %s326 = sand.u32 %s111, 1
        %s327 = scalar_lea.vmem [#allocation8], %s326
        // Predicated region
        $region49: #{tpu_custom_call.1} parent=31 // pred_check
          %p328 = pneg %p121
        $region50: #{tpu_custom_call.1} parent=31 // pred_check_branch
          %330 = sbr.rel (%p328) target = $region52
        $region51: #{tpu_custom_call.1} parent=31 // pred_region
          %s332 = ssub.s32 16, 16
          %333 = vsyncadd %s325, %s332
          %s334 = smul.addr %s25, 16
          %s335 = scalar_lea.hbm %s3, %s334
          %s337 = sshll.u32 %s327, 4
          %s338 = int_to_ptr.vmem [resolvable:$true] %s337
          %340 = dma.vmem_to_hbm [thread:$0]  %s338, 16, %s335, %s325
        $region52: #{tpu_custom_call.1} parent=31 // pred_fallthru
          _
      $region32: #{tpu_custom_call.1} parent=5 // pred_fallthru
        _
      %p341 = scmp.le.s32.totalorder 2, %s16
      // Predicated region
      $region53: #{tpu_custom_call.1} parent=5 // pred_check
        %p342 = pneg %p341
      $region54: #{tpu_custom_call.1} parent=5 // pred_check_branch
        %344 = sbr.rel (%p342) target = $region56
      $region55: #{tpu_custom_call.1} parent=5 // pred_region
        %s345 = ssub.s32 %s16, 2
        // Predicated region
        $region57: #{tpu_custom_call.1} parent=55 // pred_check
          %p346 = pneg %p127
        $region58: #{tpu_custom_call.1} parent=55 // pred_check_branch
          %348 = sbr.rel (%p346) target = $region60
        $region59: #{tpu_custom_call.1} parent=55 // pred_region
          %s349 = sand.u32 %s112, 1
          %s350 = scalar_lea.sflag [#allocation5], %s349
          %s351 = sand.u32 %s112, 1
          %s352 = scalar_lea.vmem [#allocation8], %s351
          %353 = dma.done %s350, 16
        $region60: #{tpu_custom_call.1} parent=55 // pred_fallthru
          _
      $region56: #{tpu_custom_call.1} parent=5 // pred_fallthru
        _
    $region6: #{tpu_custom_call.1} parent=1 // loop_footer
      %s20 = sadd.s32 1, %s16
    $region7: #{tpu_custom_call.1} parent=1 // loop_footer_branch
      %15 = sbr.rel target = $region3
    $region8: #{tpu_custom_call.1} parent=1 // loop_exit
      _
    %354 = vsyncpa [#allocation4], 1
    %s355 = scalar_lea.sflag [#allocation4], 1
    %356 = vsyncpa %s355, 1
    %357 = vsyncpa [#allocation7], 1
    %358 = vsyncpa [#allocation5], 1
    %s359 = scalar_lea.sflag [#allocation5], 1
    %360 = vsyncpa %s359, 1

// kernel: tpu_custom_call.1
$region0: #{tpu_custom_call.1}
  #allocation0 [shape = 'u32[]', space=smem, size = 0x4, offset = 0x4, fixed_abs, tag = 'smem constant byte address 0x4 - core index']
  #allocation1 [shape = 'u32[144,128]{1,0:T(1,128)}', space=vmem, size = 0x12000, scoped, tag = 'internal scratch']
  #allocation2 [shape = 'f32[1,4,128]{2,1,0:T(4,128)}', space=vmem, size = 0x800, scoped, tag = 'scratch operand']
  %s0 = inlined_call_operand.hbm [shape: f32[2,4,256], index: 0, kind: input, shape index: {}]
  %s1 = inlined_call_operand.hbm [shape: f32[4,128], index: 1, kind: input, shape index: {}]
  %s2 = inlined_call_operand.vmem [shape: f32[1,128], index: 2, kind: input, shape index: {}]
  %s3 = inlined_call_operand.hbm [shape: f32[2,1,128], index: 3, kind: output, shape index: {}]
  %s4 = sld [smem:[#allocation0]]
  $region61: #{tpu_custom_call.1} parent=0
    _
  %s6 = ssub.s32 1, %s4
  %s7 = scalar_select 0, %s6, %s4
  $region1: #{tpu_custom_call.1} parent=0
    #allocation3 [shape = 'u8[8192]{0}', space=vmem, size = 0x2000, scoped, tag = 'input window, operand 0']
    #allocation4 [shape = 's32[2]{0}', space=sflag, size = 0x8, scoped, tag = 'scoped memory for tpu_custom_call.1']
    #allocation5 [shape = 's32[2]{0}', space=sflag, size = 0x8, scoped, tag = 'scoped memory for tpu_custom_call.1']
    #allocation6 [shape = 'u8[2048]{0}', space=vmem, size = 0x800, scoped, tag = 'input window, operand 1, single buffered']
    #allocation7 [shape = 's32[1]{0}', space=sflag, size = 0x4, scoped, tag = 'scoped memory for tpu_custom_call.1']
    #allocation8 [shape = 'u8[1024]{0}', space=vmem, size = 0x400, scoped, tag = 'output window, operand 0']
    %8 = vsyncpa [#allocation4], 0
    %s9 = scalar_lea.sflag [#allocation4], 1
    %10 = vsyncpa %s9, 0
    %11 = vsyncpa [#allocation7], 0
    %12 = vsyncpa [#allocation5], 0
    %s13 = scalar_lea.sflag [#allocation5], 1
    %14 = vsyncpa %s13, 0
    loop: start=0, step=1, limit=4
    $region2: #{tpu_custom_call.1} parent=1 // loop_pre_header
      _
    $region3: #{tpu_custom_call.1} parent=1 // loop_header
      %s16 = sphi 0, %s20
      %p17 = scmp.ge.s32.totalorder %s16, 4
      %s23 = sphi 0, %s35
      %s24 = sphi 0, %s31
      %s25 = sphi 0, %s23
      %s26 = sphi 0, %s24
      %s27 = sphi 0, %s25
      %s28 = sphi 0, %s26
      %s40 = sphi 0, %s42
      %s43 = sphi 0, %s40
      %s44 = sphi 0, %s43
      %s60 = sphi 0, %s44
      %s64 = sphi 0, %s64
      %s66 = sphi 0, %s64
      %s67 = sphi 0, %s66
      %s81 = sphi 0, %s67
      %s85 = sphi 0, %s85
      %s87 = sphi 0, %s85
      %s88 = sphi 0, %s87
      %s102 = sphi 0, %s88
      %s108 = sphi 0, %s110
      %s111 = sphi 0, %s108
      %s112 = sphi 0, %s111
      %s128 = sphi 0, %s112
    $region4: #{tpu_custom_call.1} parent=1 // loop_header_branch
      %19 = sbr.rel (%p17) target = $region8
    $region5: #{tpu_custom_call.1} parent=1 // loop_body
      %s21 = ssub.s32 %s16, 1
      %s22 = ssub.s32 %s16, 2
      %s29 = sadd.s32 1, %s24
      %p30 = scmp.ge.s32.totalorder %s29, 1
      %s31 = scalar_select %p30, 0, %s29
      %s32 = sadd.s32 1, %s23
      %s33 = scalar_select %p30, %s32, %s23
      %p34 = scmp.ge.s32.totalorder %s33, 2
      %s35 = scalar_select %p34, 0, %s33
      %s36 = ssub.s32 %s23, %s35
      %s37 = ssub.s32 %s24, %s31
      %s38 = sor.u32 %s36, %s37
      %p39 = scmp.eq.s32.totalorder %s38, 0
      %s41 = sadd.s32 %s40, 1
      %s42 = scalar_select %p39, %s40, %s41
      %p45 = pneg %p39
      %p46 = scmp.eq.s32.totalorder %s16, 1
      %p47 = por %p45, %p46
      %p48 = scmp.ne.s32.totalorder %s40, %s43
      %p49 = scmp.eq.s32.totalorder %s16, 0
      %p50 = por %p48, %p49
      %p51 = scmp.ne.s32.totalorder %s40, %s43
      %p52 = scmp.eq.s32.totalorder %s21, 1
      %p53 = por %p51, %p52
      %p54 = scmp.ne.s32.totalorder %s43, %s44
      %p55 = scmp.eq.s32.totalorder %s21, 0
      %p56 = por %p54, %p55
      %p57 = scmp.ne.s32.totalorder %s43, %s44
      %p58 = scmp.eq.s32.totalorder %s22, 1
      %p59 = por %p57, %p58
      %p61 = scmp.ne.s32.totalorder %s44, %s60
      %p62 = scmp.eq.s32.totalorder %s22, 0
      %p63 = por %p61, %p62
      %s65 = sadd.s32 %s64, 1
      %p68 = scmp.eq.s32.totalorder %s16, 1
      %p69 = scmp.ne.s32.totalorder %s64, %s66
      %p70 = scmp.eq.s32.totalorder %s16, 0
      %p71 = por %p69, %p70
      %p72 = scmp.ne.s32.totalorder %s64, %s66
      %p73 = scmp.eq.s32.totalorder %s21, 1
      %p74 = por %p72, %p73
      %p75 = scmp.ne.s32.totalorder %s66, %s67
      %p76 = scmp.eq.s32.totalorder %s21, 0
      %p77 = por %p75, %p76
      %p78 = scmp.ne.s32.totalorder %s66, %s67
      %p79 = scmp.eq.s32.totalorder %s22, 1
      %p80 = por %p78, %p79
      %p82 = scmp.ne.s32.totalorder %s67, %s81
      %p83 = scmp.eq.s32.totalorder %s22, 0
      %p84 = por %p82, %p83
      %s86 = sadd.s32 %s85, 1
      %p89 = scmp.eq.s32.totalorder %s16, 1
      %p90 = scmp.ne.s32.totalorder %s85, %s87
      %p91 = scmp.eq.s32.totalorder %s16, 0
      %p92 = por %p90, %p91
      %p93 = scmp.ne.s32.totalorder %s85, %s87
      %p94 = scmp.eq.s32.totalorder %s21, 1
      %p95 = por %p93, %p94
      %p96 = scmp.ne.s32.totalorder %s87, %s88
      %p97 = scmp.eq.s32.totalorder %s21, 0
      %p98 = por %p96, %p97
      %p99 = scmp.ne.s32.totalorder %s87, %s88
      %p100 = scmp.eq.s32.totalorder %s22, 1
      %p101 = por %p99, %p100
      %p103 = scmp.ne.s32.totalorder %s88, %s102
      %p104 = scmp.eq.s32.totalorder %s22, 0
      %p105 = por %p103, %p104
      %s106 = ssub.s32 %s23, %s35
      %p107 = scmp.eq.s32.totalorder %s106, 0
      %s109 = sadd.s32 %s108, 1
      %s110 = scalar_select %p107, %s108, %s109
      %p113 = pneg %p107
      %p114 = scmp.eq.s32.totalorder %s16, 1
      %p115 = por %p113, %p114
      %p116 = scmp.ne.s32.totalorder %s108, %s111
      %p117 = scmp.eq.s32.totalorder %s16, 0
      %p118 = por %p116, %p117
      %p119 = scmp.ne.s32.totalorder %s108, %s111
      %p120 = scmp.eq.s32.totalorder %s21, 1
      %p121 = por %p119, %p120
      %p122 = scmp.ne.s32.totalorder %s111, %s112
      %p123 = scmp.eq.s32.totalorder %s21, 0
      %p124 = por %p122, %p123
      %p125 = scmp.ne.s32.totalorder %s111, %s112
      %p126 = scmp.eq.s32.totalorder %s22, 1
      %p127 = por %p125, %p126
      %p129 = scmp.ne.s32.totalorder %s112, %s128
      %p130 = scmp.eq.s32.totalorder %s22, 0
      %p131 = por %p129, %p130
      %p132 = scmp.le.s32.totalorder 1, %s16
      %p133 = scmp.lt.s32.totalorder %s16, 3
      %p134 = pnand %p132, %p133
      %p135 = pneg %p134
      // Predicated region
      $region9: #{tpu_custom_call.1} parent=5 // pred_check
        _
      $region10: #{tpu_custom_call.1} parent=5 // pred_check_branch
        %137 = sbr.rel (%p134) target = $region12
      $region11: #{tpu_custom_call.1} parent=5 // pred_region
        %s138 = ssub.s32 %s16, 1
        // Predicated region
        $region13: #{tpu_custom_call.1} parent=11 // pred_check
          %p139 = pneg %p77
        $region14: #{tpu_custom_call.1} parent=11 // pred_check_branch
          %141 = sbr.rel (%p139) target = $region16
        $region15: #{tpu_custom_call.1} parent=11 // pred_region
          %s143 = ssub.s32 64, 64
          %144 = vsyncadd [#allocation7], %s143
          %s146 = sshll.u32 [#allocation6], 4
          %s147 = int_to_ptr.vmem [resolvable:$true] %s146
          %149 = dma.hbm_to_vmem [thread:$0]  %s1, 64, %s147, [#allocation7]
        $region16: #{tpu_custom_call.1} parent=11 // pred_fallthru
          _
        // Predicated region
        $region17: #{tpu_custom_call.1} parent=11 // pred_check
          %p150 = pneg %p98
        $region18: #{tpu_custom_call.1} parent=11 // pred_check_branch
          %152 = sbr.rel (%p150) target = $region20
        $region19: #{tpu_custom_call.1} parent=11 // pred_region
          _
        $region20: #{tpu_custom_call.1} parent=11 // pred_fallthru
          _
      $region12: #{tpu_custom_call.1} parent=5 // pred_fallthru
        _
      %p153 = scmp.lt.s32.totalorder %s16, 2
      // Predicated region
      $region21: #{tpu_custom_call.1} parent=5 // pred_check
        %p154 = pneg %p153
      $region22: #{tpu_custom_call.1} parent=5 // pred_check_branch
        %156 = sbr.rel (%p154) target = $region24
      $region23: #{tpu_custom_call.1} parent=5 // pred_region
        // Predicated region
        $region25: #{tpu_custom_call.1} parent=23 // pred_check
          %p157 = pneg %p50
        $region26: #{tpu_custom_call.1} parent=23 // pred_check_branch
          %159 = sbr.rel (%p157) target = $region28
        $region27: #{tpu_custom_call.1} parent=23 // pred_region
          %s160 = sand.u32 %s40, 1
          %s161 = scalar_lea.sflag [#allocation4], %s160
          %s162 = sand.u32 %s40, 1
          %s163 = smul.addr %s162, 8
          %s164 = scalar_lea.vmem [#allocation3], %s163
          %s165 = smul.u32 2, %s24
          %s167 = ssub.s32 128, 128
          %168 = vsyncadd %s161, %s167
          %s169 = smul.addr %s23, 2
          %s170 = sadd.s32 %s165, %s169
          %s171 = smul.addr %s170, 64
          %s172 = scalar_lea.hbm %s0, %s171
          %s174 = sshll.u32 %s164, 4
          %s175 = int_to_ptr.vmem [resolvable:$true] %s174
          %177 = dma.hbm_to_vmem [thread:$0]  %s172, 128, %s175, %s161
        $region28: #{tpu_custom_call.1} parent=23 // pred_fallthru
          _
      $region24: #{tpu_custom_call.1} parent=5 // pred_fallthru
        _
      %p178 = scmp.le.s32.totalorder 1, %s16
      %p179 = scmp.lt.s32.totalorder %s16, 3
      %p180 = pnand %p178, %p179
      %p181 = pneg %p180
      // Predicated region
      $region29: #{tpu_custom_call.1} parent=5 // pred_check
        _
      $region30: #{tpu_custom_call.1} parent=5 // pred_check_branch
        %183 = sbr.rel (%p180) target = $region32
      $region31: #{tpu_custom_call.1} parent=5 // pred_region
        %s184 = ssub.s32 %s16, 1
        %s185 = sand.u32 %s43, 1
        %s186 = scalar_lea.sflag [#allocation4], %s185
        %s187 = sand.u32 %s43, 1
        %s188 = smul.addr %s187, 8
        %s189 = scalar_lea.vmem [#allocation3], %s188
        // Predicated region
        $region33: #{tpu_custom_call.1} parent=31 // pred_check
          %p190 = pneg %p56
        $region34: #{tpu_custom_call.1} parent=31 // pred_check_branch
          %192 = sbr.rel (%p190) target = $region36
        $region35: #{tpu_custom_call.1} parent=31 // pred_region
          %193 = dma.done %s186, 128
        $region36: #{tpu_custom_call.1} parent=31 // pred_fallthru
          _
        // Predicated region
        $region37: #{tpu_custom_call.1} parent=31 // pred_check
          %p194 = pneg %p77
        $region38: #{tpu_custom_call.1} parent=31 // pred_check_branch
          %196 = sbr.rel (%p194) target = $region40
        $region39: #{tpu_custom_call.1} parent=31 // pred_region
          %197 = dma.done [#allocation7], 64
        $region40: #{tpu_custom_call.1} parent=31 // pred_fallthru
          _
        %s198 = sand.u32 %s43, 1
        %s199 = scalar_lea.sflag [#allocation4], %s198
        %s200 = sand.u32 %s43, 1
        %s201 = smul.addr %s200, 8
        %s202 = scalar_lea.vmem [#allocation3], %s201
        %p203 = pneg %p56
        %p204 = pneg %p53
        %p205 = pneg %p77
        %p206 = pneg %p74
        %p207 = pneg %p98
        %p208 = pneg %p95
        %p209 = pneg %p124
        %p210 = pneg %p121
        %s211 = sand.u32 %s111, 1
        %s212 = scalar_lea.sflag [#allocation5], %s211
        %s213 = sand.u32 %s111, 1
        %s214 = scalar_lea.vmem [#allocation8], %s213
        %s215 = smul.u32 2, %s26
        %p216 = scmp.eq.s32.totalorder %s26, 0
        // Predicated region
        $region41: #{tpu_custom_call.1} parent=31 // pred_check
          %p217 = pneg %p216
        $region42: #{tpu_custom_call.1} parent=31 // pred_check_branch
          %219 = sbr.rel (%p217) target = $region44
        $region43: #{tpu_custom_call.1} parent=31 // pred_region
          %220 = vst [vmem:[#allocation2] sm:$0xf] -inf
        $region44: #{tpu_custom_call.1} parent=31 // pred_fallthru
          _
        %v221 = vld [vmem:[%s189] sm:$0xf]
        %v222 = vld [vmem:[#allocation2] sm:$0xf]
        %v223 = vmax.f32 %v222, %v221
        %224 = vst [vmem:[#allocation2] sm:$0xf] %v223
        %v225 = vld [vmem:[%s189 + $0x4] sm:$0xf]
        %v226 = vld [vmem:[#allocation2] sm:$0xf]
        %v227 = vmax.f32 %v226, %v225
        %228 = vst [vmem:[#allocation2] sm:$0xf] %v227
        // Predicated region
        $region45: #{tpu_custom_call.1} parent=31 // pred_check
          %p229 = pneg %p216
        $region46: #{tpu_custom_call.1} parent=31 // pred_check_branch
          %231 = sbr.rel (%p229) target = $region48
        $region47: #{tpu_custom_call.1} parent=31 // pred_region
          %v232 = vld [vmem:[#allocation2] sm:$0xf]
          %vm233 = vcmask 1043456
          %v234 = vsel %vm233, %v232, -inf
          %235 = vmax.xlane.f32.xlu0 %v234
          %v236 = vpop.xlane.xlu0 %235
          %v237 = vld [vmem:[#allocation6] sm:$0xf]
          %v238 = vld [vmem:[%s2] sm:$0x1]
          %v240 = vlaneseq
          %v241 = vand.u32 %v240, 127
          %v242 = vlaneseq
          %v243 = vshrl.u32 %v242, 7
          %v244 = vsub.s32 %v241, %v243
          %v245 = vrot.slane %v236, %v244
          %vm246 = vcmask 31744
          %v247 = vsel %vm246, %v245, 0
          %v250 = vsel %vm233, %v237, 0
          %252 = vmatprep.subr.mxu0 0.0
          %253 = vmatpush1.msra.mxu0 0.0
          %254 = vmatprep.subr.mxu0 0.0
          %255 = vmatpush1.msra.mxu0 0.0
          %256 = vmatprep.subr.mxu0 0.0
          %257 = vmatpush1.msra.mxu0 0.0
          %258 = vmatprep.subr.mxu0 0.0
          %259 = vmatpush1.msra.mxu0 0.0
          %260 = vmatprep.subr.mxu0 0.0
          %261 = vmatpush1.msra.mxu0 0.0
          %262 = vmatprep.subr.mxu0 0.0
          %263 = vmatpush1.msra.mxu0 0.0
          %264 = vmatprep.subr.mxu0 0.0
          %265 = vmatpush1.msra.mxu0 0.0
          %266 = vmatprep.subr.mxu0 0.0
          %267 = vmatpush1.msra.mxu0 0.0
          %268 = vmatprep.subr.mxu0 0.0
          %269 = vmatpush1.msra.mxu0 0.0
          %270 = vmatprep.subr.mxu0 0.0
          %271 = vmatpush1.msra.mxu0 0.0
          %272 = vmatprep.subr.mxu0 0.0
          %273 = vmatpush1.msra.mxu0 0.0
          %274 = vmatprep.subr.mxu0 0.0
          %275 = vmatpush1.msra.mxu0 0.0
          %276 = vmatprep.subr.mxu0 0.0
          %277 = vmatpush1.msra.mxu0 0.0
          %278 = vmatprep.subr.mxu0 0.0
          %279 = vmatpush1.msra.mxu0 0.0
          %280 = vmatprep.subr.mxu0 0.0
          %281 = vmatpush1.msra.mxu0 0.0
          %282 = vmatprep.subr.mxu0 0.0
          %283 = vmatpush1.msra.mxu0 %v250
          %284 = vmatprep.subr.mxu0 0.0
          %285 = vmatpush2.msra.mxu0 0.0
          %286 = vmatprep.subr.mxu0 0.0
          %287 = vmatpush2.msra.mxu0 0.0
          %288 = vmatprep.subr.mxu0 0.0
          %289 = vmatpush2.msra.mxu0 0.0
          %290 = vmatprep.subr.mxu0 0.0
          %291 = vmatpush2.msra.mxu0 0.0
          %292 = vmatprep.subr.mxu0 0.0
          %293 = vmatpush2.msra.mxu0 0.0
          %294 = vmatprep.subr.mxu0 0.0
          %295 = vmatpush2.msra.mxu0 0.0
          %296 = vmatprep.subr.mxu0 0.0
          %297 = vmatpush2.msra.mxu0 0.0
          %298 = vmatprep.subr.mxu0 0.0
          %299 = vmatpush2.msra.mxu0 0.0
          %300 = vmatprep.subr.mxu0 0.0
          %301 = vmatpush2.msra.mxu0 0.0
          %302 = vmatprep.subr.mxu0 0.0
          %303 = vmatpush2.msra.mxu0 0.0
          %304 = vmatprep.subr.mxu0 0.0
          %305 = vmatpush2.msra.mxu0 0.0
          %306 = vmatprep.subr.mxu0 0.0
          %307 = vmatpush2.msra.mxu0 0.0
          %308 = vmatprep.subr.mxu0 0.0
          %309 = vmatpush2.msra.mxu0 0.0
          %310 = vmatprep.subr.mxu0 0.0
          %311 = vmatpush2.msra.mxu0 0.0
          %312 = vmatprep.subr.mxu0 0.0
          %313 = vmatpush2.msra.mxu0 0.0
          %314 = vmatprep.subr.mxu0 0.0
          %315 = vmatpush2.msra.mxu0 0.0
          %316 = vmatprep.mubr.f32.mxu0 0.0
          %317 = vmatmul.mubr.f32.gmra.mxu0 %v247
          %v318 = vpop.f32.mrf.mxu0
          %v319 = vadd.f32 %v238, %v318
          %v320 = vpop.f32.mrf.mxu0
          %321 = vdwg.mxu0
          %v322 = vmax.f32 %v319, 0.0
          %323 = vst [vmem:[%s214] sm:$0x1] %v322
        $region48: #{tpu_custom_call.1} parent=31 // pred_fallthru
          _
        %s324 = sand.u32 %s111, 1
        %s325 = scalar_lea.sflag [#allocation5], %s324
        %s326 = sand.u32 %s111, 1
        %s327 = scalar_lea.vmem [#allocation8], %s326
        // Predicated region
        $region49: #{tpu_custom_call.1} parent=31 // pred_check
          %p328 = pneg %p121
        $region50: #{tpu_custom_call.1} parent=31 // pred_check_branch
          %330 = sbr.rel (%p328) target = $region52
        $region51: #{tpu_custom_call.1} parent=31 // pred_region
          %s332 = ssub.s32 16, 16
          %333 = vsyncadd %s325, %s332
          %s334 = smul.addr %s25, 16
          %s335 = scalar_lea.hbm %s3, %s334
          %s337 = sshll.u32 %s327, 4
          %s338 = int_to_ptr.vmem [resolvable:$true] %s337
          %340 = dma.vmem_to_hbm [thread:$0]  %s338, 16, %s335, %s325
        $region52: #{tpu_custom_call.1} parent=31 // pred_fallthru
          _
      $region32: #{tpu_custom_call.1} parent=5 // pred_fallthru
        _
      %p341 = scmp.le.s32.totalorder 2, %s16
      // Predicated region
      $region53: #{tpu_custom_call.1} parent=5 // pred_check
        %p342 = pneg %p341
      $region54: #{tpu_custom_call.1} parent=5 // pred_check_branch
        %344 = sbr.rel (%p342) target = $region56
      $region55: #{tpu_custom_call.1} parent=5 // pred_region
        %s345 = ssub.s32 %s16, 2
        // Predicated region
        $region57: #{tpu_custom_call.1} parent=55 // pred_check
          %p346 = pneg %p127
        $region58: #{tpu_custom_call.1} parent=55 // pred_check_branch
          %348 = sbr.rel (%p346) target = $region60
        $region59: #{tpu_custom_call.1} parent=55 // pred_region
          %s349 = sand.u32 %s112, 1
          %s350 = scalar_lea.sflag [#allocation5], %s349
          %s351 = sand.u32 %s112, 1
          %s352 = scalar_lea.vmem [#allocation8], %s351
          %353 = dma.done %s350, 16
        $region60: #{tpu_custom_call.1} parent=55 // pred_fallthru
          _
      $region56: #{tpu_custom_call.1} parent=5 // pred_fallthru
        _
    $region6: #{tpu_custom_call.1} parent=1 // loop_footer
      %s20 = sadd.s32 1, %s16
    $region7: #{tpu_custom_call.1} parent=1 // loop_footer_branch
      %15 = sbr.rel target = $region3
    $region8: #{tpu_custom_call.1} parent=1 // loop_exit
      _
    %354 = vsyncpa [#allocation4], 1
    %s355 = scalar_lea.sflag [#allocation4], 1
    %356 = vsyncpa %s355, 1
    %357 = vsyncpa [#allocation7], 1
    %358 = vsyncpa [#allocation5], 1
    %s359 = scalar_lea.sflag [#allocation5], 1
    %360 = vsyncpa %s359, 1

</llo_original>
